<compile_context>
chip_gen: v5e
topology: v5e:2x2
jax: 0.10.0
libtpu: 0.0.40
codegen_flags: <defaults>
</compile_context>

<pallas_src>
import jax
import jax.numpy as jnp
import numpy as np
from jax.experimental import pallas as pl
from jax.experimental.pallas import tpu as pltpu

LANE = 128
SUBLANE = 8
B_ALIGN = 16      # batch-tile alignment (valid sublane tiling for f32 and bf16)
IN_ALIGN = 16     # input-feature padding so in-kernel W row slices stay tile-aligned
MAX_TB = 512      # per-grid-step batch tile cap (mem-bound roofline sweet spot)


def _round_up(n, m):
    return ((n + m - 1) // m) * m


def _cdiv(a, b):
    return -(-a // b)


# ----------------------------------------------------------------------------- kernel
def _mlp3_kernel(x_ref, w_ref, b_ref, o_ref):
    """Packed 3-layer MLP bank: (Linear -> ReLU) x2 -> Linear in one pass.

    x_ref : [TB, D_IN_P]          activations (f32 or bf16)
    w_ref : [D_IN_P + 2*PW, PW]   row-stacked packed [W1; W2; W3], same dtype as x
    b_ref : [3, PW]               packed biases (f32)
    o_ref : [TB, PW]              lane-dense output slab (f32), single unmasked store
    """
    f32 = jnp.float32
    d_in = x_ref.shape[1]
    pw = w_ref.shape[1]
    cdt = w_ref.dtype

    x = x_ref[...]
    w1 = w_ref[0:d_in, :]
    w2 = w_ref[d_in:d_in + pw, :]
    w3 = w_ref[d_in + pw:d_in + 2 * pw, :]
    b = b_ref[...]

    h = jnp.dot(x, w1, preferred_element_type=f32) + b[0:1, :]
    h = jnp.maximum(h, 0.0)
    h = jnp.dot(h.astype(cdt), w2, preferred_element_type=f32) + b[1:2, :]
    h = jnp.maximum(h, 0.0)
    o = jnp.dot(h.astype(cdt), w3, preferred_element_type=f32) + b[2:3, :]
    o_ref[...] = o.astype(o_ref.dtype)


# ----------------------------------------------------------------------------- packing
def _pack_heads(heads, total_in, hidden):
    """Pack several 3-layer MLP heads into one block-structured weight stack.

    heads: list of (in_start, params), params = (w1, b1, w2, b2, w3, b3) with
           w1: [in_dim, hidden] reading columns [in_start, in_start+in_dim) of the
           (concatenated) kernel input. Layer-3 outputs are laid out consecutively
           from output-slab column 0, in list order.
    Returns float32 numpy arrays:
           W = [W1; W2; W3] of shape [d_in_p + 2*pw, pw],  B of shape [3, pw].
    """
    n = len(heads)
    total_out = sum(int(np.asarray(p[4]).shape[1]) for _, p in heads)
    d_in_p = _round_up(total_in, IN_ALIGN)
    pw = max(_round_up(n * hidden, LANE), _round_up(total_out, LANE))

    w1p = np.zeros((d_in_p, pw), np.float32)
    w2p = np.zeros((pw, pw), np.float32)
    w3p = np.zeros((pw, pw), np.float32)
    bp = np.zeros((3, pw), np.float32)

    out_off = 0
    for h_idx, (in_start, params) in enumerate(heads):
        w1, b1, w2, b2, w3, b3 = (np.asarray(a, np.float32) for a in params)
        in_dim, out_dim = w1.shape[0], w3.shape[1]
        hs = h_idx * hidden
        w1p[in_start:in_start + in_dim, hs:hs + hidden] = w1
        w2p[hs:hs + hidden, hs:hs + hidden] = w2
        w3p[hs:hs + hidden, out_off:out_off + out_dim] = w3
        bp[0, hs:hs + hidden] = b1.reshape(-1)
        bp[1, hs:hs + hidden] = b2.reshape(-1)
        bp[2, out_off:out_off + out_dim] = b3.reshape(-1)
        out_off += out_dim

    return np.concatenate([w1p, w2p, w3p], axis=0), bp


# ----------------------------------------------------------------------------- wrapper
def _batch_tiling(batch):
    b = max(int(batch), 1)
    if b <= 128:
        tb = _round_up(b, B_ALIGN)
        return tb, tb
    # batch > 128: use an even tile count >= 2 so both v7x TensorCores get work on the
    # "parallel" axis; cap the per-step tile at MAX_TB (large tiles ~85% HBM roofline).
    n = max(2, _cdiv(b, MAX_TB))
    n = _round_up(n, 2)
    tb = _round_up(_cdiv(b, n), B_ALIGN)
    return tb, tb * n


@jax.jit
def _mlp3_forward(x_in, w_packed, b_packed):
    """Run the packed 3-layer MLP bank. Returns the [batch, PW] f32 output slab."""
    batch, d_in = x_in.shape
    pw = w_packed.shape[1]
    d_in_p = w_packed.shape[0] - 2 * pw

    tb, bp = _batch_tiling(batch)
    xp = x_in
    if d_in < d_in_p:
        xp = jnp.pad(xp, ((0, 0), (0, d_in_p - d_in)))
    if batch < bp:
        xp = jnp.pad(xp, ((0, bp - batch), (0, 0)))
    xp = xp.astype(w_packed.dtype)
    n_tiles = bp // tb

    flops = 2 * bp * pw * (d_in_p + 2 * pw)
    bytes_accessed = (bp * d_in_p * xp.dtype.itemsize
                      + int(w_packed.size) * w_packed.dtype.itemsize
                      + int(b_packed.size) * 4
                      + bp * pw * 4)

    out = pl.pallas_call(
        _mlp3_kernel,
        out_shape=jax.ShapeDtypeStruct((bp, pw), jnp.float32),
        grid=(n_tiles,),
        in_specs=[
            pl.BlockSpec((tb, d_in_p), lambda i: (i, 0)),       # batch tile
            pl.BlockSpec(w_packed.shape, lambda i: (0, 0)),     # VMEM-resident weights
            pl.BlockSpec(b_packed.shape, lambda i: (0, 0)),     # VMEM-resident biases
        ],
        out_specs=pl.BlockSpec((tb, pw), lambda i: (i, 0)),
        compiler_params=pltpu.CompilerParams(
            dimension_semantics=("parallel",),
        ),
        cost_estimate=pl.CostEstimate(flops=int(flops), transcendentals=0,
                                      bytes_accessed=int(bytes_accessed)),
    )(xp, w_packed, b_packed)

    return out[:batch]


# ----------------------------------------------------------------------------- params
def _init_mlp(key, in_dim, hidden, out_dim):
    """Deterministic init matching nn.Linear default scale; weights stored [in, out]."""
    ks = jax.random.split(key, 6)

    def lin(kw, kb, fan_in, fan_out):
        bound = 1.0 / float(np.sqrt(fan_in))
        w = jax.random.uniform(kw, (fan_in, fan_out), jnp.float32, -bound, bound)
        b = jax.random.uniform(kb, (1, fan_out), jnp.float32, -bound, bound)
        return w, b

    w1, b1 = lin(ks[0], ks[1], in_dim, hidden)
    w2, b2 = lin(ks[2], ks[3], hidden, hidden)
    w3, b3 = lin(ks[4], ks[5], hidden, out_dim)
    return (w1, b1, w2, b2, w3, b3)


class PallasModel:
    """JAX/Pallas equivalent of the PyTorch Model (forward pass only)."""

    def __init__(self, input_size, goal_size, action_size, N_gaussians,
                 hidden=32, compute_dtype=jnp.bfloat16, key=None):
        if key is None:
            key = jax.random.PRNGKey(0)
        k_enc, k_pol, k_mdn = jax.random.split(key, 3)
        self.input_size = input_size
        self.goal_size = goal_size
        self.action_size = action_size
        self.N_gaussians = N_gaussians
        self.hidden = hidden
        self.compute_dtype = compute_dtype

        # Raw per-head parameters (f32 masters; weights stored [in, out]).
        # Note: if loading real PyTorch weights, nn.Linear stores W as [out, in]
        # and must be transposed into this layout.
        self.encoder = _init_mlp(k_enc, input_size, hidden, action_size)
        self.policy = _init_mlp(k_pol, input_size + goal_size, hidden, action_size)
        self.MDN = _init_mlp(k_mdn, goal_size, hidden, action_size * N_gaussians)

        # Fused pack over the concatenated [x, g] input; layer-3 columns already at
        # their final output-slab offsets (z | a | rho | zeros).
        wf, bf = _pack_heads(
            [(0, self.encoder), (0, self.policy), (input_size, self.MDN)],
            total_in=input_size + goal_size, hidden=hidden)
        self._fused_w = jnp.asarray(wf).astype(compute_dtype)
        self._fused_b = jnp.asarray(bf)                      # biases stay f32

        # Encoder-only pack (g is None path), same kernel.
        we, be = _pack_heads([(0, self.encoder)], total_in=input_size, hidden=hidden)
        self._enc_w = jnp.asarray(we).astype(compute_dtype)
        self._enc_b = jnp.asarray(be)

    def forward(self, x, g=None):
        A = self.action_size
        if g is None:
            out = _mlp3_forward(x, self._enc_w, self._enc_b)
            return out[:, 0:A], None, None
        xg = jnp.concatenate([x, g], axis=-1)
        out = _mlp3_forward(xg, self._fused_w, self._fused_b)
        z = out[:, 0:A]
        a = out[:, A:2 * A]
        rho = out[:, 2 * A:2 * A + A * self.N_gaussians].reshape(
            -1, self.N_gaussians, A)
        return z, a, rho


# ----------------------------------------------------------------------------- main
if __name__ == "__main__":
    input_size, goal_size, action_size, N_gaussians = 16, 8, 4, 3
    batch = 8

    key = jax.random.PRNGKey(0)
    kx, kg, kp = jax.random.split(key, 3)
    x = jax.random.normal(kx, (batch, input_size), jnp.float32)
    g = jax.random.normal(kg, (batch, goal_size), jnp.float32)

    # f32 model for strict numerical verification; bf16 model (same weights) exercises
    # the MXU-native operand path recommended for v6e/v7x.
    m32 = PallasModel(input_size, goal_size, action_size, N_gaussians,
                      hidden=32, compute_dtype=jnp.float32, key=kp)
    mbf = PallasModel(input_size, goal_size, action_size, N_gaussians,
                      hidden=32, compute_dtype=jnp.bfloat16, key=kp)

    # Pure-JAX reference of the same module (f32 master weights).
    def ref_mlp(inp, p):
        w1, b1, w2, b2, w3, b3 = p
        h = jnp.maximum(inp @ w1 + b1, 0.0)
        h = jnp.maximum(h @ w2 + b2, 0.0)
        return h @ w3 + b3

    z_ref = ref_mlp(x, m32.encoder)
    a_ref = ref_mlp(jnp.concatenate([x, g], axis=-1), m32.policy)
    rho_ref = ref_mlp(g, m32.MDN).reshape(-1, N_gaussians, action_size)

    # Path without goal (encoder-only kernel)
    z_only, a_none, rho_none = m32.forward(x)
    jax.block_until_ready(z_only)
    assert a_none is None and rho_none is None
    assert z_only.shape == (batch, action_size)

    # Path with goal (single fused kernel), f32 operands
    z, a, rho = m32.forward(x, g)
    jax.block_until_ready((z, a, rho))
    assert z.shape == (batch, action_size)
    assert a.shape == (batch, action_size)
    assert rho.shape == (batch, N_gaussians, action_size)

    np.testing.assert_allclose(np.asarray(z_only), np.asarray(z_ref), rtol=1e-5, atol=1e-5)
    np.testing.assert_allclose(np.asarray(z), np.asarray(z_ref), rtol=1e-5, atol=1e-5)
    np.testing.assert_allclose(np.asarray(a), np.asarray(a_ref), rtol=1e-5, atol=1e-5)
    np.testing.assert_allclose(np.asarray(rho), np.asarray(rho_ref), rtol=1e-5, atol=1e-5)

    # bf16-operand path (f32 accumulate / bias / ReLU) — loose tolerance
    zb, ab, rb = mbf.forward(x, g)
    jax.block_until_ready((zb, ab, rb))
    np.testing.assert_allclose(np.asarray(zb), np.asarray(z_ref), rtol=5e-2, atol=5e-2)
    np.testing.assert_allclose(np.asarray(ab), np.asarray(a_ref), rtol=5e-2, atol=5e-2)
    np.testing.assert_allclose(np.asarray(rb), np.asarray(rho_ref), rtol=5e-2, atol=5e-2)

    print("KERNEL_OK")
</pallas_src>

<mosaic_0001>
module attributes {stable_mosaic.version = 11 : i64} {
  func.func @_mlp3_kernel(%arg0: i32, %arg1: memref<16x16xf32, #tpu.memory_space<vmem>>, %arg2: memref<272x128xf32, #tpu.memory_space<vmem>>, %arg3: memref<3x128xf32, #tpu.memory_space<vmem>>, %arg4: memref<16x128xf32, #tpu.memory_space<vmem>>) attributes {dimension_semantics = [#tpu.dimension_semantics<parallel>], iteration_bounds = array<i64: 1>, scalar_prefetch = 0 : i64, scratch_operands = 0 : i64, tpu.core_type = #tpu.core_type<tc>, window_params = [{transform_indices = @transform_0, window_bounds = array<i64: 16, 16>}, {pipeline_mode = #tpu.pipeline_mode<synchronous>, transform_indices = @transform_1, window_bounds = array<i64: 272, 128>}, {pipeline_mode = #tpu.pipeline_mode<synchronous>, transform_indices = @transform_2, window_bounds = array<i64: 3, 128>}, {transform_indices = @transform_3, window_bounds = array<i64: 16, 128>}]} {
    %c0 = arith.constant 0 : index
    %c0_0 = arith.constant 0 : index
    %0 = vector.load %arg1[%c0, %c0_0] : memref<16x16xf32, #tpu.memory_space<vmem>>, vector<16x16xf32>
    %c0_1 = arith.constant 0 : index
    %c0_2 = arith.constant 0 : index
    %1 = vector.load %arg2[%c0_1, %c0_2] : memref<272x128xf32, #tpu.memory_space<vmem>>, vector<16x128xf32>
    %c16 = arith.constant 16 : index
    %c0_3 = arith.constant 0 : index
    %2 = vector.load %arg2[%c16, %c0_3] : memref<272x128xf32, #tpu.memory_space<vmem>>, vector<128x128xf32>
    %c144 = arith.constant 144 : index
    %c0_4 = arith.constant 0 : index
    %3 = vector.load %arg2[%c144, %c0_4] : memref<272x128xf32, #tpu.memory_space<vmem>>, vector<128x128xf32>
    %c0_5 = arith.constant 0 : index
    %c0_6 = arith.constant 0 : index
    %4 = vector.load %arg3[%c0_5, %c0_6] : memref<3x128xf32, #tpu.memory_space<vmem>>, vector<3x128xf32>
    %cst = arith.constant dense<0.000000e+00> : vector<16x128xf32>
    %5 = tpu.matmul %0, %1, %cst {dimension_numbers = #tpu.dot_dimension_numbers<[1], [0], [0], [1], [0, 0, 1, 1], [], []>} : vector<16x16xf32>, vector<16x128xf32>, vector<16x128xf32> -> vector<16x128xf32>
    %6 = vector.extract_strided_slice %4 {offsets = [0, 0], sizes = [1, 128], strides = [1, 1]} : vector<3x128xf32> to vector<1x128xf32>
    %7 = vector.broadcast %6 : vector<1x128xf32> to vector<16x128xf32>
    %8 = arith.addf %5, %7 : vector<16x128xf32>
    %cst_7 = arith.constant 0.000000e+00 : f32
    %9 = vector.broadcast %cst_7 : f32 to vector<16x128xf32>
    %10 = arith.maximumf %8, %9 : vector<16x128xf32>
    %cst_8 = arith.constant dense<0.000000e+00> : vector<16x128xf32>
    %11 = tpu.matmul %10, %2, %cst_8 {dimension_numbers = #tpu.dot_dimension_numbers<[1], [0], [0], [1], [0, 0, 1, 1], [], []>} : vector<16x128xf32>, vector<128x128xf32>, vector<16x128xf32> -> vector<16x128xf32>
    %12 = vector.extract_strided_slice %4 {offsets = [1, 0], sizes = [1, 128], strides = [1, 1]} : vector<3x128xf32> to vector<1x128xf32>
    %13 = vector.broadcast %12 : vector<1x128xf32> to vector<16x128xf32>
    %14 = arith.addf %11, %13 : vector<16x128xf32>
    %cst_9 = arith.constant 0.000000e+00 : f32
    %15 = vector.broadcast %cst_9 : f32 to vector<16x128xf32>
    %16 = arith.maximumf %14, %15 : vector<16x128xf32>
    %cst_10 = arith.constant dense<0.000000e+00> : vector<16x128xf32>
    %17 = tpu.matmul %16, %3, %cst_10 {dimension_numbers = #tpu.dot_dimension_numbers<[1], [0], [0], [1], [0, 0, 1, 1], [], []>} : vector<16x128xf32>, vector<128x128xf32>, vector<16x128xf32> -> vector<16x128xf32>
    %18 = vector.extract_strided_slice %4 {offsets = [2, 0], sizes = [1, 128], strides = [1, 1]} : vector<3x128xf32> to vector<1x128xf32>
    %19 = vector.broadcast %18 : vector<1x128xf32> to vector<16x128xf32>
    %20 = arith.addf %17, %19 : vector<16x128xf32>
    %c0_11 = arith.constant 0 : index
    %c0_12 = arith.constant 0 : index
    %21 = vector.load %arg4[%c0_11, %c0_12] : memref<16x128xf32, #tpu.memory_space<vmem>>, vector<16x128xf32>
    tpu.vector_store %arg4[%c0_11, %c0_12], %20 {strides = array<i32>} : memref<16x128xf32, #tpu.memory_space<vmem>>, vector<16x128xf32>,
    return
  }
  func.func @transform_0(%arg0: i32) -> (i32, i32) {
    %c0_i32 = arith.constant 0 : i32
    %c0_i32_0 = arith.constant 0 : i32
    return %arg0, %c0_i32 : i32, i32
  }
  func.func @transform_1(%arg0: i32) -> (i32, i32) {
    %c0_i32 = arith.constant 0 : i32
    %c0_i32_0 = arith.constant 0 : i32
    %c0_i32_1 = arith.constant 0 : i32
    return %c0_i32, %c0_i32_0 : i32, i32
  }
  func.func @transform_2(%arg0: i32) -> (i32, i32) {
    %c0_i32 = arith.constant 0 : i32
    %c0_i32_0 = arith.constant 0 : i32
    %c0_i32_1 = arith.constant 0 : i32
    return %c0_i32, %c0_i32_0 : i32, i32
  }
  func.func @transform_3(%arg0: i32) -> (i32, i32) {
    %c0_i32 = arith.constant 0 : i32
    %c0_i32_0 = arith.constant 0 : i32
    return %arg0, %c0_i32 : i32, i32
  }
}

</mosaic_0001>

<llo_original>
// kernel: _mlp3_forward.1
$region0: #{_mlp3_forward.1}
  #allocation0 [shape = 'u32[]', space=smem, size = 0x4, offset = 0x4, fixed_abs, tag = 'smem constant byte address 0x4 - core index']
  #allocation1 [shape = 'u32[72,128]{1,0:T(1,128)}', space=vmem, size = 0x9000, scoped, tag = 'internal scratch']
  %s0 = inlined_call_operand.vmem [shape: f32[16,16], index: 0, kind: input, shape index: {}]
  %s1 = inlined_call_operand.hbm [shape: f32[272,128], index: 1, kind: input, shape index: {}]
  %s2 = inlined_call_operand.vmem [shape: f32[3,128], index: 2, kind: input, shape index: {}]
  %s3 = inlined_call_operand.vmem [shape: f32[16,128], index: 3, kind: output, shape index: {}]
  %s4 = sld [smem:[#allocation0]]
  $region26: #{_mlp3_forward.1} parent=0
    _
  %s6 = ssub.s32 1, %s4
  %s7 = scalar_select 0, %s6, %s4
  $region1: #{_mlp3_forward.1} parent=0
    #allocation2 [shape = 'u8[139264]{0}', space=vmem, size = 0x22000, scoped, tag = 'input window, operand 1, single buffered']
    #allocation3 [shape = 's32[1]{0}', space=sflag, size = 0x4, scoped, tag = 'scoped memory for _mlp3_forward.1']
    %8 = vsyncpa [#allocation3], 0
    // Predicated region
    $region2: #{_mlp3_forward.1} parent=1 // pred_check
      _
    $region3: #{_mlp3_forward.1} parent=1 // pred_check_branch
      %10 = sbr.rel (0) target = $region5
    $region4: #{_mlp3_forward.1} parent=1 // pred_region
      _
    $region5: #{_mlp3_forward.1} parent=1 // pred_fallthru
      _
    // Predicated region
    $region6: #{_mlp3_forward.1} parent=1 // pred_check
      _
    $region7: #{_mlp3_forward.1} parent=1 // pred_check_branch
      %12 = sbr.rel (0) target = $region9
    $region8: #{_mlp3_forward.1} parent=1 // pred_region
      %14 = vsyncadd [#allocation3], 0
      %s15 = sshll.u32 %s1, 4
      %s16 = int_to_ptr.hbm [resolvable:$true] %s15
      %s17 = sshll.u32 [#allocation2], 4
      %s18 = int_to_ptr.vmem [resolvable:$true] %s17
      %23 = dma.hbm_to_vmem [thread:$0]  %s16, 4352, %s18, [#allocation3], 128, 128, 8
    $region9: #{_mlp3_forward.1} parent=1 // pred_fallthru
      _
    // Predicated region
    $region10: #{_mlp3_forward.1} parent=1 // pred_check
      _
    $region11: #{_mlp3_forward.1} parent=1 // pred_check_branch
      %25 = sbr.rel (0) target = $region13
    $region12: #{_mlp3_forward.1} parent=1 // pred_region
      _
    $region13: #{_mlp3_forward.1} parent=1 // pred_fallthru
      _
    // Predicated region
    $region14: #{_mlp3_forward.1} parent=1 // pred_check
      _
    $region15: #{_mlp3_forward.1} parent=1 // pred_check_branch
      %27 = sbr.rel (0) target = $region17
    $region16: #{_mlp3_forward.1} parent=1 // pred_region
      %29 = dma.done [#allocation3], 4352
    $region17: #{_mlp3_forward.1} parent=1 // pred_fallthru
      _
    %v30 = vld [vmem:[%s0] sm:$0xff]
    %v31 = vld [vmem:[%s0 + $0x8] sm:$0xff]
    %v32 = vld [vmem:[#allocation2] sm:$0xff]
    %v33 = vld [vmem:[#allocation2 + $0x8] sm:$0xff]
    %v34 = vld [vmem:[#allocation2 + $0x10] sm:$0xff]
    %v35 = vld [vmem:[#allocation2 + $0x18] sm:$0xff]
    %v36 = vld [vmem:[#allocation2 + $0x20] sm:$0xff]
    %v37 = vld [vmem:[#allocation2 + $0x28] sm:$0xff]
    %v38 = vld [vmem:[#allocation2 + $0x30] sm:$0xff]
    %v39 = vld [vmem:[#allocation2 + $0x38] sm:$0xff]
    %v40 = vld [vmem:[#allocation2 + $0x40] sm:$0xff]
    %v41 = vld [vmem:[#allocation2 + $0x48] sm:$0xff]
    %v42 = vld [vmem:[#allocation2 + $0x50] sm:$0xff]
    %v43 = vld [vmem:[#allocation2 + $0x58] sm:$0xff]
    %v44 = vld [vmem:[#allocation2 + $0x60] sm:$0xff]
    %v45 = vld [vmem:[#allocation2 + $0x68] sm:$0xff]
    %v46 = vld [vmem:[#allocation2 + $0x70] sm:$0xff]
    %v47 = vld [vmem:[#allocation2 + $0x78] sm:$0xff]
    %v48 = vld [vmem:[#allocation2 + $0x80] sm:$0xff]
    %v49 = vld [vmem:[#allocation2 + $0x88] sm:$0xff]
    %v50 = vld [vmem:[#allocation2 + $0x90] sm:$0xff]
    %v51 = vld [vmem:[#allocation2 + $0x98] sm:$0xff]
    %v52 = vld [vmem:[#allocation2 + $0xa0] sm:$0xff]
    %v53 = vld [vmem:[#allocation2 + $0xa8] sm:$0xff]
    %v54 = vld [vmem:[#allocation2 + $0xb0] sm:$0xff]
    %v55 = vld [vmem:[#allocation2 + $0xb8] sm:$0xff]
    %v56 = vld [vmem:[#allocation2 + $0xc0] sm:$0xff]
    %v57 = vld [vmem:[#allocation2 + $0xc8] sm:$0xff]
    %v58 = vld [vmem:[#allocation2 + $0xd0] sm:$0xff]
    %v59 = vld [vmem:[#allocation2 + $0xd8] sm:$0xff]
    %v60 = vld [vmem:[#allocation2 + $0xe0] sm:$0xff]
    %v61 = vld [vmem:[#allocation2 + $0xe8] sm:$0xff]
    %v62 = vld [vmem:[#allocation2 + $0xf0] sm:$0xff]
    %v63 = vld [vmem:[#allocation2 + $0xf8] sm:$0xff]
    %v64 = vld [vmem:[#allocation2 + $0x100] sm:$0xff]
    %v65 = vld [vmem:[#allocation2 + $0x108] sm:$0xff]
    %v66 = vld [vmem:[%s2] sm:$0x7]
    %v67 = vperm.slane %v66, 0
    %vm68 = vcmask 130048
    %v70 = vsel %vm68, %v30, 0
    %v73 = vsel %vm68, %v31, 0
    %75 = vmatpush.msra.mxu0 0.0
    %76 = vmatpush.msra.mxu0 0.0
    %77 = vmatpush.msra.mxu0 0.0
    %78 = vmatpush.msra.mxu0 0.0
    %79 = vmatpush.msra.mxu0 0.0
    %80 = vmatpush.msra.mxu0 0.0
    %81 = vmatpush.msra.mxu0 0.0
    %82 = vmatpush.msra.mxu0 0.0
    %83 = vmatpush.msra.mxu0 0.0
    %84 = vmatpush.msra.mxu0 0.0
    %85 = vmatpush.msra.mxu0 0.0
    %86 = vmatpush.msra.mxu0 0.0
    %87 = vmatpush.msra.mxu0 0.0
    %88 = vmatpush.msra.mxu0 0.0
    %89 = vmatpush.msra.mxu0 %v33
    %90 = vmatpush.msra.mxu0 %v32
    %91 = vmatmul.f32.gmra.mxu0 %v70
    %v92 = vpop.f32.mrf.mxu0
    %v93 = vadd.f32 %v67, %v92
    %94 = vmatmul.f32.gmra.mxu0 %v73
    %v95 = vpop.f32.mrf.mxu0
    %v96 = vadd.f32 %v67, %v95
    %97 = vdwg.mxu0
    %v98 = vmax.f32 %v93, 0.0
    %v99 = vmax.f32 %v96, 0.0
    %v100 = vperm.slane %v66, 1
    %101 = vmatpush.msra.mxu0 %v49
    %102 = vmatpush.msra.mxu0 %v48
    %103 = vmatpush.msra.mxu0 %v47
    %104 = vmatpush.msra.mxu0 %v46
    %105 = vmatpush.msra.mxu0 %v45
    %106 = vmatpush.msra.mxu0 %v44
    %107 = vmatpush.msra.mxu0 %v43
    %108 = vmatpush.msra.mxu0 %v42
    %109 = vmatpush.msra.mxu0 %v41
    %110 = vmatpush.msra.mxu0 %v40
    %111 = vmatpush.msra.mxu0 %v39
    %112 = vmatpush.msra.mxu0 %v38
    %113 = vmatpush.msra.mxu0 %v37
    %114 = vmatpush.msra.mxu0 %v36
    %115 = vmatpush.msra.mxu0 %v35
    %116 = vmatpush.msra.mxu0 %v34
    %117 = vmatmul.f32.gmra.mxu0 %v98
    %v118 = vpop.f32.mrf.mxu0
    %v119 = vadd.f32 %v100, %v118
    %120 = vmatmul.f32.gmra.mxu0 %v99
    %v121 = vpop.f32.mrf.mxu0
    %v122 = vadd.f32 %v100, %v121
    %123 = vdwg.mxu0
    %v124 = vmax.f32 %v119, 0.0
    %v125 = vmax.f32 %v122, 0.0
    %v126 = vperm.slane %v66, 2
    %127 = vmatpush.msra.mxu0 %v65
    %128 = vmatpush.msra.mxu0 %v64
    %129 = vmatpush.msra.mxu0 %v63
    %130 = vmatpush.msra.mxu0 %v62
    %131 = vmatpush.msra.mxu0 %v61
    %132 = vmatpush.msra.mxu0 %v60
    %133 = vmatpush.msra.mxu0 %v59
    %134 = vmatpush.msra.mxu0 %v58
    %135 = vmatpush.msra.mxu0 %v57
    %136 = vmatpush.msra.mxu0 %v56
    %137 = vmatpush.msra.mxu0 %v55
    %138 = vmatpush.msra.mxu0 %v54
    %139 = vmatpush.msra.mxu0 %v53
    %140 = vmatpush.msra.mxu0 %v52
    %141 = vmatpush.msra.mxu0 %v51
    %142 = vmatpush.msra.mxu0 %v50
    %143 = vmatmul.f32.gmra.mxu0 %v124
    %v144 = vpop.f32.mrf.mxu0
    %v145 = vadd.f32 %v126, %v144
    %146 = vmatmul.f32.gmra.mxu0 %v125
    %v147 = vpop.f32.mrf.mxu0
    %v148 = vadd.f32 %v126, %v147
    %149 = vdwg.mxu0
    %150 = vst [vmem:[%s3] sm:$0xff] %v145
    %151 = vst [vmem:[%s3 + $0x8] sm:$0xff] %v148
    // Predicated region
    $region18: #{_mlp3_forward.1} parent=1 // pred_check
      _
    $region19: #{_mlp3_forward.1} parent=1 // pred_check_branch
      %153 = sbr.rel (0) target = $region21
    $region20: #{_mlp3_forward.1} parent=1 // pred_region
      _
    $region21: #{_mlp3_forward.1} parent=1 // pred_fallthru
      _
    // Predicated region
    $region22: #{_mlp3_forward.1} parent=1 // pred_check
      _
    $region23: #{_mlp3_forward.1} parent=1 // pred_check_branch
      %155 = sbr.rel (0) target = $region25
    $region24: #{_mlp3_forward.1} parent=1 // pred_region
      _
    $region25: #{_mlp3_forward.1} parent=1 // pred_fallthru
      _
    %156 = vsyncpa [#allocation3], 1

</llo_original>
